<compile_context>
chip_gen: v5e
topology: v5e:2x2
jax: 0.10.0
libtpu: 0.0.40
codegen_flags: <defaults>
</compile_context>

<pallas_src>
import math
import functools

import jax
import jax.numpy as jnp
from jax.experimental import pallas as pl
from jax.experimental.pallas import tpu as pltpu

# ---------------- problem sizes (small, consistent with the module) -------------
B, S, D = 2, 8, 32          # batch, seq len, d_model
DROPOUT_P = 0.1             # nn.Dropout(p) -- identity in eval mode


def make_pe_table(d_model, length):
    """Positional-encoding buffer, built only up to `length` rows (not max_len)."""
    position = jnp.arange(length, dtype=jnp.float32)[:, None]               # (length, 1)
    div_term = jnp.exp(jnp.arange(0, d_model, 2, dtype=jnp.float32)
                       * -(math.log(10000.0) / d_model))                    # (d_model/2,)
    angles = position * div_term                                            # (length, d_model/2)
    pe = jnp.zeros((length, d_model), jnp.float32)
    pe = pe.at[:, 0::2].set(jnp.sin(angles))
    pe = pe.at[:, 1::2].set(jnp.cos(angles))
    return pe


def pe_add_kernel(x_ref, pe_ref, o_ref):
    # One batch row per grid step. pe_ref is the (1, 1, S*D) PE slab; its
    # BlockSpec index_map is constant, so it is fetched into VMEM once and
    # reused across all batch steps. Same shapes -> plain VPU add, no broadcast.
    o_ref[...] = x_ref[...] + pe_ref[...]
    # TODO(synk): training-mode dropout (pltpu.prng_seed + pltpu.prng_random_bits
    # + jnp.where) should ride here under the mem-bound add; eval mode = identity.


@jax.jit
def positional_encoding_forward(x, pe_table):
    """x: (B, S, D) f32, pe_table: (>=S, D) f32. Returns (B, S, D)."""
    b, s, d = x.shape
    # Lane-dense layout plumbing (free, contiguous reshapes):
    #   x  -> (B, 1, S*D)  : batch is the (parallel) grid axis, S*D fills lanes.
    #   pe -> (1, 1, S*D)  : one slab, constant block index across the grid.
    # S*D = 256 here, a multiple of 128 -> unmasked vld/vadd/vst.
    x3d = x.reshape(b, 1, s * d)
    pe3d = pe_table[:s, :].reshape(1, 1, s * d)

    fn = pl.pallas_call(
        pe_add_kernel,
        out_shape=jax.ShapeDtypeStruct((b, 1, s * d), x.dtype),
        grid=(b,),
        in_specs=[
            # x: one batch row per grid step.
            pl.BlockSpec((1, 1, s * d), lambda i: (i, 0, 0)),
            # pe: constant block index -> DMA'd once, VMEM-resident across steps.
            pl.BlockSpec((1, 1, s * d), lambda i: (0, 0, 0)),
        ],
        out_specs=pl.BlockSpec((1, 1, s * d), lambda i: (i, 0, 0)),
        # x is dead after the add: write in place, no extra output HBM buffer.
        input_output_aliases={0: 0},
        compiler_params=pltpu.CompilerParams(
            dimension_semantics=("parallel",)),   # megacore-sharded batch on v7x
    )
    out3d = fn(x3d, pe3d)
    return out3d.reshape(b, s, d)


# ---------------- pure-JAX reference for a correctness check ----------------
def ref_forward(x, pe_table):
    return x + pe_table[None, :x.shape[1], :]


if __name__ == "__main__":
    key = jax.random.PRNGKey(0)
    x = jax.random.normal(key, (B, S, D), jnp.float32)

    # Buffer is built once (module-init equivalent) and only to the needed length.
    pe_table = make_pe_table(D, S)

    out = positional_encoding_forward(x, pe_table)
    out = jax.block_until_ready(out)

    ref = ref_forward(x, pe_table)
    assert out.shape == (B, S, D)
    assert jnp.allclose(out, ref, atol=1e-6, rtol=1e-6), (
        f"max abs err {jnp.max(jnp.abs(out - ref))}")

    print("KERNEL_OK")
</pallas_src>

<mosaic_0001>
module attributes {stable_mosaic.version = 11 : i64} {
  func.func @pe_add_kernel(%arg0: i32, %arg1: memref<1x1x256xf32, #tpu.memory_space<vmem>>, %arg2: memref<1x1x256xf32, #tpu.memory_space<vmem>>, %arg3: memref<1x1x256xf32, #tpu.memory_space<vmem>>) attributes {dimension_semantics = [#tpu.dimension_semantics<parallel>], iteration_bounds = array<i64: 2>, scalar_prefetch = 0 : i64, scratch_operands = 0 : i64, tpu.core_type = #tpu.core_type<tc>, window_params = [{transform_indices = @transform_0, window_bounds = array<i64: 1, 1, 256>}, {pipeline_mode = #tpu.pipeline_mode<synchronous>, transform_indices = @transform_1, window_bounds = array<i64: 1, 1, 256>}, {transform_indices = @transform_2, window_bounds = array<i64: 1, 1, 256>}]} {
    %c0 = arith.constant 0 : index
    %c0_0 = arith.constant 0 : index
    %c0_1 = arith.constant 0 : index
    %0 = vector.load %arg1[%c0, %c0_0, %c0_1] : memref<1x1x256xf32, #tpu.memory_space<vmem>>, vector<1x1x256xf32>
    %c0_2 = arith.constant 0 : index
    %c0_3 = arith.constant 0 : index
    %c0_4 = arith.constant 0 : index
    %1 = vector.load %arg2[%c0_2, %c0_3, %c0_4] : memref<1x1x256xf32, #tpu.memory_space<vmem>>, vector<1x1x256xf32>
    %2 = arith.addf %0, %1 : vector<1x1x256xf32>
    %c0_5 = arith.constant 0 : index
    %c0_6 = arith.constant 0 : index
    %c0_7 = arith.constant 0 : index
    %3 = vector.load %arg3[%c0_5, %c0_6, %c0_7] : memref<1x1x256xf32, #tpu.memory_space<vmem>>, vector<1x1x256xf32>
    tpu.vector_store %arg3[%c0_5, %c0_6, %c0_7], %2 {strides = array<i32>} : memref<1x1x256xf32, #tpu.memory_space<vmem>>, vector<1x1x256xf32>,
    return
  }
  func.func @transform_0(%arg0: i32) -> (i32, i32, i32) {
    %c0_i32 = arith.constant 0 : i32
    %c0_i32_0 = arith.constant 0 : i32
    %c0_i32_1 = arith.constant 0 : i32
    return %arg0, %c0_i32, %c0_i32_0 : i32, i32, i32
  }
  func.func @transform_1(%arg0: i32) -> (i32, i32, i32) {
    %c0_i32 = arith.constant 0 : i32
    %c0_i32_0 = arith.constant 0 : i32
    %c0_i32_1 = arith.constant 0 : i32
    %c0_i32_2 = arith.constant 0 : i32
    return %c0_i32, %c0_i32_0, %c0_i32_1 : i32, i32, i32
  }
  func.func @transform_2(%arg0: i32) -> (i32, i32, i32) {
    %c0_i32 = arith.constant 0 : i32
    %c0_i32_0 = arith.constant 0 : i32
    %c0_i32_1 = arith.constant 0 : i32
    return %arg0, %c0_i32, %c0_i32_0 : i32, i32, i32
  }
}

</mosaic_0001>

<llo_original>
// kernel: positional_encoding_forward.1
$region0: #{positional_encoding_forward.1}
  #allocation0 [shape = 'u32[]', space=smem, size = 0x4, offset = 0x4, fixed_abs, tag = 'smem constant byte address 0x4 - core index']
  #allocation1 [shape = 'u32[72,128]{1,0:T(1,128)}', space=vmem, size = 0x9000, scoped, tag = 'internal scratch']
  %s0 = inlined_call_operand.vmem [shape: f32[2,1,256], index: 0, kind: input, shape index: {}, may-alias: {0,2}]
  %s1 = inlined_call_operand.vmem [shape: f32[1,1,256], index: 1, kind: input, shape index: {}]
  %s2 = inlined_call_operand.vmem [shape: f32[2,1,256], index: 2, kind: output, shape index: {}, may-alias: {0,2}]
  %s3 = sld [smem:[#allocation0]]
  $region41: #{positional_encoding_forward.1} parent=0
    _
  %s5 = ssub.s32 1, %s3
  %s6 = scalar_select 0, %s5, %s3
  loop: start=0, step=1, limit=4
  $region2: #{positional_encoding_forward.1} parent=0 // loop_pre_header
    _
  $region3: #{positional_encoding_forward.1} parent=0 // loop_header
    %s8 = sphi 0, %s12
    %p9 = scmp.ge.s32.totalorder %s8, 4
    %s18 = sphi 0, %s20
    %s21 = sphi 0, %s18
    %s22 = sphi 0, %s21
    %s38 = sphi 0, %s22
    %s42 = sphi 0, %s42
    %s44 = sphi 0, %s42
    %s45 = sphi 0, %s44
    %s59 = sphi 0, %s45
    %s65 = sphi 0, %s67
    %s68 = sphi 0, %s65
    %s69 = sphi 0, %s68
    %s85 = sphi 0, %s69
  $region4: #{positional_encoding_forward.1} parent=0 // loop_header_branch
    %11 = sbr.rel (%p9) target = $region8
  $region5: #{positional_encoding_forward.1} parent=0 // loop_body
    %s13 = ssub.s32 %s8, 1
    %s14 = ssub.s32 %s8, 2
    %s15 = sadd.s32 %s8, 1
    %s16 = ssub.s32 %s8, %s15
    %p17 = scmp.eq.s32.totalorder %s16, 0
    %s19 = sadd.s32 %s18, 1
    %s20 = scalar_select %p17, %s18, %s19
    %p23 = pneg %p17
    %p24 = scmp.eq.s32.totalorder %s8, 1
    %p25 = por %p23, %p24
    %p26 = scmp.ne.s32.totalorder %s18, %s21
    %p27 = scmp.eq.s32.totalorder %s8, 0
    %p28 = por %p26, %p27
    %p29 = scmp.ne.s32.totalorder %s18, %s21
    %p30 = scmp.eq.s32.totalorder %s13, 1
    %p31 = por %p29, %p30
    %p32 = scmp.ne.s32.totalorder %s21, %s22
    %p33 = scmp.eq.s32.totalorder %s13, 0
    %p34 = por %p32, %p33
    %p35 = scmp.ne.s32.totalorder %s21, %s22
    %p36 = scmp.eq.s32.totalorder %s14, 1
    %p37 = por %p35, %p36
    %p39 = scmp.ne.s32.totalorder %s22, %s38
    %p40 = scmp.eq.s32.totalorder %s14, 0
    %p41 = por %p39, %p40
    %s43 = sadd.s32 %s42, 1
    %p46 = scmp.eq.s32.totalorder %s8, 1
    %p47 = scmp.ne.s32.totalorder %s42, %s44
    %p48 = scmp.eq.s32.totalorder %s8, 0
    %p49 = por %p47, %p48
    %p50 = scmp.ne.s32.totalorder %s42, %s44
    %p51 = scmp.eq.s32.totalorder %s13, 1
    %p52 = por %p50, %p51
    %p53 = scmp.ne.s32.totalorder %s44, %s45
    %p54 = scmp.eq.s32.totalorder %s13, 0
    %p55 = por %p53, %p54
    %p56 = scmp.ne.s32.totalorder %s44, %s45
    %p57 = scmp.eq.s32.totalorder %s14, 1
    %p58 = por %p56, %p57
    %p60 = scmp.ne.s32.totalorder %s45, %s59
    %p61 = scmp.eq.s32.totalorder %s14, 0
    %p62 = por %p60, %p61
    %s63 = ssub.s32 %s8, %s15
    %p64 = scmp.eq.s32.totalorder %s63, 0
    %s66 = sadd.s32 %s65, 1
    %s67 = scalar_select %p64, %s65, %s66
    %p70 = pneg %p64
    %p71 = scmp.eq.s32.totalorder %s8, 1
    %p72 = por %p70, %p71
    %p73 = scmp.ne.s32.totalorder %s65, %s68
    %p74 = scmp.eq.s32.totalorder %s8, 0
    %p75 = por %p73, %p74
    %p76 = scmp.ne.s32.totalorder %s65, %s68
    %p77 = scmp.eq.s32.totalorder %s13, 1
    %p78 = por %p76, %p77
    %p79 = scmp.ne.s32.totalorder %s68, %s69
    %p80 = scmp.eq.s32.totalorder %s13, 0
    %p81 = por %p79, %p80
    %p82 = scmp.ne.s32.totalorder %s68, %s69
    %p83 = scmp.eq.s32.totalorder %s14, 1
    %p84 = por %p82, %p83
    %p86 = scmp.ne.s32.totalorder %s69, %s85
    %p87 = scmp.eq.s32.totalorder %s14, 0
    %p88 = por %p86, %p87
    %p89 = scmp.le.s32.totalorder 1, %s8
    %p90 = scmp.lt.s32.totalorder %s8, 3
    %p91 = pnand %p89, %p90
    %p92 = pneg %p91
    // Predicated region
    $region9: #{positional_encoding_forward.1} parent=5 // pred_check
      _
    $region10: #{positional_encoding_forward.1} parent=5 // pred_check_branch
      %94 = sbr.rel (%p91) target = $region12
    $region11: #{positional_encoding_forward.1} parent=5 // pred_region
      %s95 = ssub.s32 %s8, 1
      // Predicated region
      $region13: #{positional_encoding_forward.1} parent=11 // pred_check
        %p96 = pneg %p55
      $region14: #{positional_encoding_forward.1} parent=11 // pred_check_branch
        %98 = sbr.rel (%p96) target = $region16
      $region15: #{positional_encoding_forward.1} parent=11 // pred_region
        _
      $region16: #{positional_encoding_forward.1} parent=11 // pred_fallthru
        _
    $region12: #{positional_encoding_forward.1} parent=5 // pred_fallthru
      _
    %p99 = scmp.lt.s32.totalorder %s8, 2
    // Predicated region
    $region17: #{positional_encoding_forward.1} parent=5 // pred_check
      %p100 = pneg %p99
    $region18: #{positional_encoding_forward.1} parent=5 // pred_check_branch
      %102 = sbr.rel (%p100) target = $region20
    $region19: #{positional_encoding_forward.1} parent=5 // pred_region
      // Predicated region
      $region21: #{positional_encoding_forward.1} parent=19 // pred_check
        %p103 = pneg %p28
      $region22: #{positional_encoding_forward.1} parent=19 // pred_check_branch
        %105 = sbr.rel (%p103) target = $region24
      $region23: #{positional_encoding_forward.1} parent=19 // pred_region
        %p106 = scmp.lt.s32.totalorder %s8, 1
        %s107 = scalar_select %p106, %s8, 1
        %s108 = smul.addr %s107, 2
        %s109 = scalar_lea.vmem %s0, %s108
      $region24: #{positional_encoding_forward.1} parent=19 // pred_fallthru
        _
    $region20: #{positional_encoding_forward.1} parent=5 // pred_fallthru
      _
    %p110 = scmp.le.s32.totalorder 1, %s8
    %p111 = scmp.lt.s32.totalorder %s8, 3
    %p112 = pnand %p110, %p111
    %p113 = pneg %p112
    // Predicated region
    $region25: #{positional_encoding_forward.1} parent=5 // pred_check
      _
    $region26: #{positional_encoding_forward.1} parent=5 // pred_check_branch
      %115 = sbr.rel (%p112) target = $region28
    $region27: #{positional_encoding_forward.1} parent=5 // pred_region
      %s116 = ssub.s32 %s8, 1
      %p117 = scmp.lt.s32.totalorder %s13, 1
      %s118 = scalar_select %p117, %s13, 1
      %s119 = smul.addr %s118, 2
      %s120 = scalar_lea.vmem %s0, %s119
      %p121 = pneg %p34
      %p122 = pneg %p31
      %p123 = pneg %p55
      %p124 = pneg %p52
      %p125 = pneg %p81
      %p126 = pneg %p78
      %p127 = scmp.lt.s32.totalorder %s13, 1
      %s128 = scalar_select %p127, %s13, 1
      %s129 = smul.addr %s128, 2
      %s130 = scalar_lea.vmem %s2, %s129
      %p131 = scmp.lt.s32.totalorder %s13, 1
      %s132 = scalar_select %p131, %s13, 1
      %s133 = smul.addr %s132, 2
      %s134 = scalar_lea.vmem %s0, %s133
      %p135 = scmp.lt.s32.totalorder %s13, 1
      %s136 = scalar_select %p135, %s13, 1
      %s137 = smul.addr %s136, 2
      %s138 = scalar_lea.vmem %s2, %s137
      %v139 = vld [vmem:[%s134] sm:$0x3]
      %v140 = vld [vmem:[%s1] sm:$0x3]
      %v141 = vadd.f32 %v139, %v140
      %v142 = vlaneseq
      %vm143 = vcmp.ge.s32.totalorder %v142, 0
      %vm144 = vcmp.lt.s32.totalorder %v142, 256
      %vm145 = vmand %vm143, %vm144
      %146 = vst.msk [vmem:[%s138] sm:$0x3] %vm145, %v141
      %p147 = scmp.lt.s32.totalorder %s13, 1
      %s148 = scalar_select %p147, %s13, 1
      %s149 = smul.addr %s148, 2
      %s150 = scalar_lea.vmem %s2, %s149
      // Predicated region
      $region29: #{positional_encoding_forward.1} parent=27 // pred_check
        %p151 = pneg %p78
      $region30: #{positional_encoding_forward.1} parent=27 // pred_check_branch
        %153 = sbr.rel (%p151) target = $region32
      $region31: #{positional_encoding_forward.1} parent=27 // pred_region
        _
      $region32: #{positional_encoding_forward.1} parent=27 // pred_fallthru
        _
    $region28: #{positional_encoding_forward.1} parent=5 // pred_fallthru
      _
    %p154 = scmp.le.s32.totalorder 2, %s8
    // Predicated region
    $region33: #{positional_encoding_forward.1} parent=5 // pred_check
      %p155 = pneg %p154
    $region34: #{positional_encoding_forward.1} parent=5 // pred_check_branch
      %157 = sbr.rel (%p155) target = $region36
    $region35: #{positional_encoding_forward.1} parent=5 // pred_region
      %s158 = ssub.s32 %s8, 2
      // Predicated region
      $region37: #{positional_encoding_forward.1} parent=35 // pred_check
        %p159 = pneg %p84
      $region38: #{positional_encoding_forward.1} parent=35 // pred_check_branch
        %161 = sbr.rel (%p159) target = $region40
      $region39: #{positional_encoding_forward.1} parent=35 // pred_region
        %p162 = scmp.lt.s32.totalorder %s14, 1
        %s163 = scalar_select %p162, %s14, 1
        %s164 = smul.addr %s163, 2
        %s165 = scalar_lea.vmem %s2, %s164
      $region40: #{positional_encoding_forward.1} parent=35 // pred_fallthru
        _
    $region36: #{positional_encoding_forward.1} parent=5 // pred_fallthru
      _
  $region6: #{positional_encoding_forward.1} parent=0 // loop_footer
    %s12 = sadd.s32 1, %s8
  $region7: #{positional_encoding_forward.1} parent=0 // loop_footer_branch
    %7 = sbr.rel target = $region3
  $region8: #{positional_encoding_forward.1} parent=0 // loop_exit
    _

</llo_original>
